<compile_context>
chip_gen: v7x
topology: tpu7x:2x2x1
jax: 0.10.0
libtpu: 0.0.40
codegen_flags: <defaults>
</compile_context>

<pallas_src>
import functools

import jax
import jax.numpy as jnp
from jax.experimental import pallas as pl
from jax.experimental.pallas import tpu as pltpu

EPS = 1e-8
ENTROPY_WEIGHT = 2.0
_TARGET_TILE_BYTES = 2 << 20     # ~2 MiB per input tile (per pipeline buffer)
_MAX_TILE_B = 1 << 16            # cap the row tile


def scan_loss_kernel(anchors_ref, neighbors_ref, out_ref, cons_acc, colsum_acc,
                     *, batch, tile_b, entropy_weight, needs_mask):
    i = pl.program_id(0)

    @pl.when(i == 0)
    def _init():
        cons_acc[...] = jnp.zeros_like(cons_acc)
        colsum_acc[...] = jnp.zeros_like(colsum_acc)

    a = anchors_ref[...].astype(jnp.float32)      # [tile_b, n]
    nb = neighbors_ref[...].astype(jnp.float32)   # [tile_b, n]

    # Row-wise dot product; BCE(sim, 1) = -log(sim), log clamped at -100 like
    # PyTorch BCELoss.  (sim <= 0 would give NaN exactly as in the reference.)
    sim = jnp.sum(a * nb, axis=1, keepdims=True)                 # [tile_b, 1]
    term = -jnp.maximum(jnp.log(sim), -100.0)                    # [tile_b, 1]

    if needs_mask:
        # Ragged last tile: rows past the true batch contain undefined data.
        row_ids = i * tile_b + jax.lax.broadcasted_iota(
            jnp.int32, (tile_b, 1), 0)
        valid = row_ids < batch                                  # [tile_b, 1]
        term = jnp.where(valid, term, 0.0)
        a = jnp.where(valid, a, 0.0)

    cons_acc[...] += jnp.sum(term, axis=0, keepdims=True)        # (1, 1)
    colsum_acc[...] += jnp.sum(a, axis=0, keepdims=True)         # (1, n)

    @pl.when(i == pl.num_programs(0) - 1)
    def _finalize():
        inv_b = jnp.float32(1.0 / batch)
        consistency = jnp.sum(cons_acc[...]) * inv_b
        p = jnp.maximum(colsum_acc[...] * inv_b, jnp.float32(EPS))   # [1, n]
        ent = -jnp.sum(p * jnp.log(p))
        total = consistency - jnp.float32(entropy_weight) * ent
        out_ref[0] = total
        out_ref[1] = consistency
        out_ref[2] = ent


def _choose_tile_b(b, n, itemsize):
    """Pick a sublane-aligned row tile giving ~2 MiB per input buffer."""
    tile = _TARGET_TILE_BYTES // max(1, n * itemsize)
    tile = max(8, min(tile, _MAX_TILE_B))
    tile -= tile % 8
    if b <= tile:
        return b                 # single tile == full dim (always a legal block)
    return tile


def scan_loss(anchors, neighbors, *, entropy_weight=ENTROPY_WEIGHT,
              tile_b=None):
    """anchors, neighbors: [b, n] float (f32 or bf16) probability arrays.

    Returns (total_loss, consistency_loss, entropy_loss) as f32 scalars.
    """
    assert anchors.ndim == 2 and anchors.shape == neighbors.shape
    b, n = anchors.shape

    if tile_b is None:
        tile_b = _choose_tile_b(b, n, jnp.dtype(anchors.dtype).itemsize)
    elif b <= tile_b:
        tile_b = b
    else:
        tile_b = max(8, tile_b - tile_b % 8)

    grid = (pl.cdiv(b, tile_b),)
    needs_mask = (b % tile_b) != 0

    kernel = functools.partial(
        scan_loss_kernel,
        batch=b, tile_b=tile_b,
        entropy_weight=float(entropy_weight),
        needs_mask=needs_mask,
    )

    out = pl.pallas_call(
        kernel,
        out_shape=jax.ShapeDtypeStruct((3,), jnp.float32),
        grid_spec=pltpu.PrefetchScalarGridSpec(
            num_scalar_prefetch=0,
            grid=grid,
            in_specs=[
                pl.BlockSpec((tile_b, n), lambda i: (i, 0)),
                pl.BlockSpec((tile_b, n), lambda i: (i, 0)),
            ],
            # Single flat SMEM output, resident across the whole grid.
            out_specs=pl.BlockSpec(memory_space=pltpu.MemorySpace.SMEM),
            scratch_shapes=[
                pltpu.VMEM((1, 1), jnp.float32),   # consistency sum accumulator
                pltpu.VMEM((1, n), jnp.float32),   # anchor column-sum accumulator
            ],
        ),
        compiler_params=pltpu.CompilerParams(
            dimension_semantics=("arbitrary",),    # batch axis is a reduction
            vmem_limit_bytes=32 << 20,
        ),
    )(anchors, neighbors)

    return out[0], out[1], out[2]


def scan_loss_ref(anchors, neighbors, entropy_weight=ENTROPY_WEIGHT):
    """Pure-JAX reference mirroring the PyTorch module."""
    a = anchors.astype(jnp.float32)
    nb = neighbors.astype(jnp.float32)
    sim = jnp.sum(a * nb, axis=1)
    consistency = jnp.mean(-jnp.maximum(jnp.log(sim), -100.0))
    p = jnp.maximum(jnp.mean(a, axis=0), EPS)
    ent = -jnp.sum(p * jnp.log(p))
    total = consistency - entropy_weight * ent
    return total, consistency, ent


if __name__ == "__main__":
    # Case 1: ragged batch (b not a multiple of the tile) to exercise the
    # multi-step grid, scratch accumulation and last-tile masking.
    key = jax.random.PRNGKey(0)
    k1, k2 = jax.random.split(key)
    b, num_classes = 13, 10
    anchors = jax.nn.softmax(
        jax.random.normal(k1, (b, num_classes), jnp.float32), axis=1)
    neighbors = jax.nn.softmax(
        jax.random.normal(k2, (b, num_classes), jnp.float32), axis=1)

    got = scan_loss(anchors, neighbors, tile_b=8)
    jax.block_until_ready(got)
    want = scan_loss_ref(anchors, neighbors)
    for g, w in zip(got, want):
        assert jnp.allclose(g, w, rtol=1e-5, atol=1e-5), (g, w)

    # Case 2: aligned batch, adaptive tiling (single-tile path).
    k3, k4 = jax.random.split(jax.random.PRNGKey(0))
    b2, n2 = 16, 16
    a2 = jax.nn.softmax(jax.random.normal(k3, (b2, n2), jnp.float32), axis=1)
    nb2 = jax.nn.softmax(jax.random.normal(k4, (b2, n2), jnp.float32), axis=1)
    got2 = scan_loss(a2, nb2)
    jax.block_until_ready(got2)
    want2 = scan_loss_ref(a2, nb2)
    for g, w in zip(got2, want2):
        assert jnp.allclose(g, w, rtol=1e-5, atol=1e-5), (g, w)

    # Case 3: larger ragged batch with bf16 inputs to exercise the adaptive
    # multi-tile streaming path with f32 accumulation.
    k5, k6 = jax.random.split(jax.random.PRNGKey(1))
    b3, n3 = 5000, 10
    a3 = jax.nn.softmax(jax.random.normal(k5, (b3, n3), jnp.float32), axis=1)
    nb3 = jax.nn.softmax(jax.random.normal(k6, (b3, n3), jnp.float32), axis=1)
    got3 = scan_loss(a3.astype(jnp.bfloat16), nb3.astype(jnp.bfloat16),
                     tile_b=512)
    jax.block_until_ready(got3)
    want3 = scan_loss_ref(a3.astype(jnp.bfloat16), nb3.astype(jnp.bfloat16))
    for g, w in zip(got3, want3):
        assert jnp.allclose(g, w, rtol=2e-2, atol=2e-2), (g, w)

    print("KERNEL_OK")
</pallas_src>

<mosaic_0001>
module attributes {stable_mosaic.version = 11 : i64} {
  func.func @scan_loss_kernel(%arg0: i32, %arg1: memref<8x10xf32, #tpu.memory_space<vmem>>, %arg2: memref<8x10xf32, #tpu.memory_space<vmem>>, %arg3: memref<3xf32, #tpu.memory_space<smem>>, %arg4: memref<1x1xf32, #tpu.memory_space<vmem>>, %arg5: memref<1x10xf32, #tpu.memory_space<vmem>>) attributes {dimension_semantics = [#tpu.dimension_semantics<arbitrary>], iteration_bounds = array<i64: 2>, scalar_prefetch = 0 : i64, scratch_operands = 2 : i64, tpu.core_type = #tpu.core_type<tc>, window_params = [{transform_indices = @transform_0, window_bounds = array<i64: 8, 10>}, {transform_indices = @transform_1, window_bounds = array<i64: 8, 10>}, {transform_indices = @transform_2, window_bounds = array<i64: 3>}]} {
    %c0_i32 = arith.constant 0 : i32
    %0 = arith.cmpi eq, %arg0, %c0_i32 : i32
    %1 = arith.extui %0 : i1 to i32
    %c0_i32_0 = arith.constant 0 : i32
    %2 = arith.cmpi ne, %1, %c0_i32_0 : i32
    scf.if %2 {
      %cst_19 = arith.constant 0.000000e+00 : f32
      %38 = vector.broadcast %cst_19 : f32 to vector<1x1xf32>
      %c0_20 = arith.constant 0 : index
      %c0_21 = arith.constant 0 : index
      %39 = vector.load %arg4[%c0_20, %c0_21] : memref<1x1xf32, #tpu.memory_space<vmem>>, vector<1x1xf32>
      tpu.vector_store %arg4[%c0_20, %c0_21], %38 {strides = array<i32>} : memref<1x1xf32, #tpu.memory_space<vmem>>, vector<1x1xf32>,
      %cst_22 = arith.constant 0.000000e+00 : f32
      %40 = vector.broadcast %cst_22 : f32 to vector<1x10xf32>
      %c0_23 = arith.constant 0 : index
      %c0_24 = arith.constant 0 : index
      %41 = vector.load %arg5[%c0_23, %c0_24] : memref<1x10xf32, #tpu.memory_space<vmem>>, vector<1x10xf32>
      tpu.vector_store %arg5[%c0_23, %c0_24], %40 {strides = array<i32>} : memref<1x10xf32, #tpu.memory_space<vmem>>, vector<1x10xf32>,
    } else {
    }
    %c0 = arith.constant 0 : index
    %c0_1 = arith.constant 0 : index
    %3 = vector.load %arg1[%c0, %c0_1] : memref<8x10xf32, #tpu.memory_space<vmem>>, vector<8x10xf32>
    %c0_2 = arith.constant 0 : index
    %c0_3 = arith.constant 0 : index
    %4 = vector.load %arg2[%c0_2, %c0_3] : memref<8x10xf32, #tpu.memory_space<vmem>>, vector<8x10xf32>
    %5 = arith.mulf %3, %4 : vector<8x10xf32>
    %cst = arith.constant dense<0.000000e+00> : vector<8xf32>
    %6 = vector.multi_reduction <add>, %5, %cst [1] : vector<8x10xf32> to vector<8xf32>
    %7 = vector.shape_cast %6 : vector<8xf32> to vector<8x1xf32>
    %8 = math.log %7 : vector<8x1xf32>
    %cst_4 = arith.constant -1.000000e+02 : f32
    %9 = vector.broadcast %cst_4 : f32 to vector<8x1xf32>
    %10 = arith.maximumf %8, %9 : vector<8x1xf32>
    %cst_5 = arith.constant 0.000000e+00 : f32
    %11 = vector.broadcast %cst_5 : f32 to vector<8x1xf32>
    %12 = arith.subf %11, %10 : vector<8x1xf32>
    %c8_i32 = arith.constant 8 : i32
    %13 = arith.muli %arg0, %c8_i32 : i32
    %14 = tpu.iota {dimensions = array<i32: 0>} : vector<8x1xi32>
    %15 = vector.broadcast %13 : i32 to vector<8x1xi32>
    %16 = arith.addi %15, %14 : vector<8x1xi32>
    %c13_i32 = arith.constant 13 : i32
    %17 = vector.broadcast %c13_i32 : i32 to vector<8x1xi32>
    %18 = arith.cmpi slt, %16, %17 : vector<8x1xi32>
    %cst_6 = arith.constant 0.000000e+00 : f32
    %19 = vector.broadcast %cst_6 : f32 to vector<8x1xf32>
    %20 = arith.select %18, %12, %19 : vector<8x1xi1>, vector<8x1xf32>
    %cst_7 = arith.constant 0.000000e+00 : f32
    %21 = vector.shape_cast %18 : vector<8x1xi1> to vector<8x1xi1>
    %22 = vector.broadcast %21 : vector<8x1xi1> to vector<8x10xi1>
    %23 = vector.broadcast %cst_7 : f32 to vector<8x10xf32>
    %24 = arith.select %22, %3, %23 : vector<8x10xi1>, vector<8x10xf32>
    %c0_8 = arith.constant 0 : index
    %c0_9 = arith.constant 0 : index
    %25 = vector.load %arg4[%c0_8, %c0_9] : memref<1x1xf32, #tpu.memory_space<vmem>>, vector<1x1xf32>
    %cst_10 = arith.constant dense<0.000000e+00> : vector<1xf32>
    %26 = vector.multi_reduction <add>, %20, %cst_10 [0] : vector<8x1xf32> to vector<1xf32>
    %27 = vector.shape_cast %26 : vector<1xf32> to vector<1x1xf32>
    %28 = arith.addf %25, %27 : vector<1x1xf32>
    %c0_11 = arith.constant 0 : index
    %c0_12 = arith.constant 0 : index
    %29 = vector.load %arg4[%c0_11, %c0_12] : memref<1x1xf32, #tpu.memory_space<vmem>>, vector<1x1xf32>
    tpu.vector_store %arg4[%c0_11, %c0_12], %28 {strides = array<i32>} : memref<1x1xf32, #tpu.memory_space<vmem>>, vector<1x1xf32>,
    %c0_13 = arith.constant 0 : index
    %c0_14 = arith.constant 0 : index
    %30 = vector.load %arg5[%c0_13, %c0_14] : memref<1x10xf32, #tpu.memory_space<vmem>>, vector<1x10xf32>
    %cst_15 = arith.constant dense<0.000000e+00> : vector<10xf32>
    %31 = vector.multi_reduction <add>, %24, %cst_15 [0] : vector<8x10xf32> to vector<10xf32>
    %32 = vector.shape_cast %31 : vector<10xf32> to vector<1x10xf32>
    %33 = arith.addf %30, %32 : vector<1x10xf32>
    %c0_16 = arith.constant 0 : index
    %c0_17 = arith.constant 0 : index
    %34 = vector.load %arg5[%c0_16, %c0_17] : memref<1x10xf32, #tpu.memory_space<vmem>>, vector<1x10xf32>
    tpu.vector_store %arg5[%c0_16, %c0_17], %33 {strides = array<i32>} : memref<1x10xf32, #tpu.memory_space<vmem>>, vector<1x10xf32>,
    %c1_i32 = arith.constant 1 : i32
    %35 = arith.cmpi eq, %arg0, %c1_i32 : i32
    %36 = arith.extui %35 : i1 to i32
    %c0_i32_18 = arith.constant 0 : i32
    %37 = arith.cmpi ne, %36, %c0_i32_18 : i32
    scf.if %37 {
      %c0_19 = arith.constant 0 : index
      %c0_20 = arith.constant 0 : index
      %38 = vector.load %arg4[%c0_19, %c0_20] : memref<1x1xf32, #tpu.memory_space<vmem>>, vector<1x1xf32>
      %39 = vector.shape_cast %38 : vector<1x1xf32> to vector<1x1x1xf32>
      %cst_21 = arith.constant dense<0.000000e+00> : vector<1xf32>
      %40 = vector.multi_reduction <add>, %39, %cst_21 [1, 2] : vector<1x1x1xf32> to vector<1xf32>
      %41 = vector.shape_cast %40 : vector<1xf32> to vector<1x1x1xf32>
      %42 = vector.extract %41[0, 0, 0] : f32 from vector<1x1x1xf32>
      %cst_22 = arith.constant 0.0769230798 : f32
      %43 = arith.mulf %42, %cst_22 : f32
      %c0_23 = arith.constant 0 : index
      %c0_24 = arith.constant 0 : index
      %44 = vector.load %arg5[%c0_23, %c0_24] : memref<1x10xf32, #tpu.memory_space<vmem>>, vector<1x10xf32>
      %cst_25 = arith.constant 0.0769230798 : f32
      %45 = vector.broadcast %cst_25 : f32 to vector<1x10xf32>
      %46 = arith.mulf %44, %45 : vector<1x10xf32>
      %cst_26 = arith.constant 9.99999993E-9 : f32
      %47 = vector.broadcast %cst_26 : f32 to vector<1x10xf32>
      %48 = arith.maximumf %46, %47 : vector<1x10xf32>
      %49 = math.log %48 : vector<1x10xf32>
      %50 = arith.mulf %48, %49 : vector<1x10xf32>
      %51 = vector.shape_cast %50 : vector<1x10xf32> to vector<1x1x10xf32>
      %cst_27 = arith.constant dense<0.000000e+00> : vector<1xf32>
      %52 = vector.multi_reduction <add>, %51, %cst_27 [1, 2] : vector<1x1x10xf32> to vector<1xf32>
      %53 = vector.shape_cast %52 : vector<1xf32> to vector<1x1x1xf32>
      %54 = vector.extract %53[0, 0, 0] : f32 from vector<1x1x1xf32>
      %cst_28 = arith.constant 0.000000e+00 : f32
      %55 = arith.subf %cst_28, %54 : f32
      %cst_29 = arith.constant 2.000000e+00 : f32
      %56 = arith.mulf %cst_29, %55 : f32
      %57 = arith.subf %43, %56 : f32
      %c0_30 = arith.constant 0 : index
      %58 = memref.load %arg3[%c0_30] : memref<3xf32, #tpu.memory_space<smem>>
      memref.store %57, %arg3[%c0_30] : memref<3xf32, #tpu.memory_space<smem>>
      %c1 = arith.constant 1 : index
      %59 = memref.load %arg3[%c1] : memref<3xf32, #tpu.memory_space<smem>>
      memref.store %43, %arg3[%c1] : memref<3xf32, #tpu.memory_space<smem>>
      %c2 = arith.constant 2 : index
      %60 = memref.load %arg3[%c2] : memref<3xf32, #tpu.memory_space<smem>>
      memref.store %55, %arg3[%c2] : memref<3xf32, #tpu.memory_space<smem>>
    } else {
    }
    return
  }
  func.func @transform_0(%arg0: i32) -> (i32, i32) {
    %c0_i32 = arith.constant 0 : i32
    %c0_i32_0 = arith.constant 0 : i32
    return %arg0, %c0_i32 : i32, i32
  }
  func.func @transform_1(%arg0: i32) -> (i32, i32) {
    %c0_i32 = arith.constant 0 : i32
    %c0_i32_0 = arith.constant 0 : i32
    return %arg0, %c0_i32 : i32, i32
  }
  func.func @transform_2(%arg0: i32) -> i32 {
    %c0_i32 = arith.constant 0 : i32
    %c0_i32_0 = arith.constant 0 : i32
    return %c0_i32 : i32
  }
}

</mosaic_0001>

<llo_original>
// kernel: tpu_custom_call.1
$region0: #{tpu_custom_call.1}
  #allocation0 [shape = 'u32[]', space=smem, size = 0x4, offset = 0x4, fixed_abs, tag = 'smem constant byte address 0x4 - core index']
  #allocation1 [shape = 'u32[144,128]{1,0:T(1,128)}', space=vmem, size = 0x12000, scoped, tag = 'internal scratch']
  #allocation2 [shape = 'f32[1,1]{1,0:T(1,128)}', space=vmem, size = 0x200, scoped, tag = 'scratch operand']
  #allocation3 [shape = 'f32[1,10]{1,0:T(1,128)}', space=vmem, size = 0x200, scoped, tag = 'scratch operand']
  %s0 = inlined_call_operand.hbm [shape: f32[13,10], index: 0, kind: input, shape index: {}]
  %s1 = inlined_call_operand.hbm [shape: f32[13,10], index: 1, kind: input, shape index: {}]
  %s2 = inlined_call_operand.hbm [shape: f32[3], index: 2, kind: output, shape index: {}]
  %s3 = sld [smem:[#allocation0]]
  $region57: #{tpu_custom_call.1} parent=0
    _
  %s5 = ssub.s32 1, %s3
  %s6 = scalar_select 0, %s5, %s3
  $region1: #{tpu_custom_call.1} parent=0
    #allocation4 [shape = 'u8[8192]{0}', space=vmem, size = 0x2000, scoped, tag = 'input window, operand 0']
    #allocation5 [shape = 's32[2]{0}', space=sflag, size = 0x8, scoped, tag = 'scoped memory for tpu_custom_call.1']
    #allocation6 [shape = 's32[2]{0}', space=sflag, size = 0x8, scoped, tag = 'scoped memory for tpu_custom_call.1']
    #allocation7 [shape = 'u8[8192]{0}', space=vmem, size = 0x2000, scoped, tag = 'input window, operand 1']
    #allocation8 [shape = 's32[2]{0}', space=sflag, size = 0x8, scoped, tag = 'scoped memory for tpu_custom_call.1']
    #allocation9 [shape = 'u8[512]{0}', space=smem, size = 0x200, scoped, tag = 'output window, operand 0, single buffered']
    %7 = vsyncpa [#allocation5], 0
    %s8 = scalar_lea.sflag [#allocation5], 1
    %9 = vsyncpa %s8, 0
    %10 = vsyncpa [#allocation8], 0
    %s11 = scalar_lea.sflag [#allocation8], 1
    %12 = vsyncpa %s11, 0
    %13 = vsyncpa [#allocation6], 0
    loop: start=0, step=1, limit=4
    $region2: #{tpu_custom_call.1} parent=1 // loop_pre_header
      _
    $region3: #{tpu_custom_call.1} parent=1 // loop_header
      %s15 = sphi 0, %s19
      %p16 = scmp.ge.s32.totalorder %s15, 4
      %s25 = sphi 0, %s27
      %s28 = sphi 0, %s25
      %s29 = sphi 0, %s28
      %s45 = sphi 0, %s29
      %s51 = sphi 0, %s53
      %s54 = sphi 0, %s51
      %s55 = sphi 0, %s54
      %s71 = sphi 0, %s55
      %s75 = sphi 0, %s75
      %s77 = sphi 0, %s75
      %s78 = sphi 0, %s77
      %s92 = sphi 0, %s78
    $region4: #{tpu_custom_call.1} parent=1 // loop_header_branch
      %18 = sbr.rel (%p16) target = $region8
    $region5: #{tpu_custom_call.1} parent=1 // loop_body
      %s20 = ssub.s32 %s15, 1
      %s21 = ssub.s32 %s15, 2
      %s22 = sadd.s32 %s15, 1
      %s23 = ssub.s32 %s15, %s22
      %p24 = scmp.eq.s32.totalorder %s23, 0
      %s26 = sadd.s32 %s25, 1
      %s27 = scalar_select %p24, %s25, %s26
      %p30 = pneg %p24
      %p31 = scmp.eq.s32.totalorder %s15, 1
      %p32 = por %p30, %p31
      %p33 = scmp.ne.s32.totalorder %s25, %s28
      %p34 = scmp.eq.s32.totalorder %s15, 0
      %p35 = por %p33, %p34
      %p36 = scmp.ne.s32.totalorder %s25, %s28
      %p37 = scmp.eq.s32.totalorder %s20, 1
      %p38 = por %p36, %p37
      %p39 = scmp.ne.s32.totalorder %s28, %s29
      %p40 = scmp.eq.s32.totalorder %s20, 0
      %p41 = por %p39, %p40
      %p42 = scmp.ne.s32.totalorder %s28, %s29
      %p43 = scmp.eq.s32.totalorder %s21, 1
      %p44 = por %p42, %p43
      %p46 = scmp.ne.s32.totalorder %s29, %s45
      %p47 = scmp.eq.s32.totalorder %s21, 0
      %p48 = por %p46, %p47
      %s49 = ssub.s32 %s15, %s22
      %p50 = scmp.eq.s32.totalorder %s49, 0
      %s52 = sadd.s32 %s51, 1
      %s53 = scalar_select %p50, %s51, %s52
      %p56 = pneg %p50
      %p57 = scmp.eq.s32.totalorder %s15, 1
      %p58 = por %p56, %p57
      %p59 = scmp.ne.s32.totalorder %s51, %s54
      %p60 = scmp.eq.s32.totalorder %s15, 0
      %p61 = por %p59, %p60
      %p62 = scmp.ne.s32.totalorder %s51, %s54
      %p63 = scmp.eq.s32.totalorder %s20, 1
      %p64 = por %p62, %p63
      %p65 = scmp.ne.s32.totalorder %s54, %s55
      %p66 = scmp.eq.s32.totalorder %s20, 0
      %p67 = por %p65, %p66
      %p68 = scmp.ne.s32.totalorder %s54, %s55
      %p69 = scmp.eq.s32.totalorder %s21, 1
      %p70 = por %p68, %p69
      %p72 = scmp.ne.s32.totalorder %s55, %s71
      %p73 = scmp.eq.s32.totalorder %s21, 0
      %p74 = por %p72, %p73
      %s76 = sadd.s32 %s75, 1
      %p79 = scmp.eq.s32.totalorder %s15, 1
      %p80 = scmp.ne.s32.totalorder %s75, %s77
      %p81 = scmp.eq.s32.totalorder %s15, 0
      %p82 = por %p80, %p81
      %p83 = scmp.ne.s32.totalorder %s75, %s77
      %p84 = scmp.eq.s32.totalorder %s20, 1
      %p85 = por %p83, %p84
      %p86 = scmp.ne.s32.totalorder %s77, %s78
      %p87 = scmp.eq.s32.totalorder %s20, 0
      %p88 = por %p86, %p87
      %p89 = scmp.ne.s32.totalorder %s77, %s78
      %p90 = scmp.eq.s32.totalorder %s21, 1
      %p91 = por %p89, %p90
      %p93 = scmp.ne.s32.totalorder %s78, %s92
      %p94 = scmp.eq.s32.totalorder %s21, 0
      %p95 = por %p93, %p94
      %p96 = scmp.le.s32.totalorder 1, %s15
      %p97 = scmp.lt.s32.totalorder %s15, 3
      %p98 = pnand %p96, %p97
      %p99 = pneg %p98
      // Predicated region
      $region9: #{tpu_custom_call.1} parent=5 // pred_check
        _
      $region10: #{tpu_custom_call.1} parent=5 // pred_check_branch
        %101 = sbr.rel (%p98) target = $region12
      $region11: #{tpu_custom_call.1} parent=5 // pred_region
        %s102 = ssub.s32 %s15, 1
      $region12: #{tpu_custom_call.1} parent=5 // pred_fallthru
        _
      %p103 = scmp.lt.s32.totalorder %s15, 2
      // Predicated region
      $region13: #{tpu_custom_call.1} parent=5 // pred_check
        %p104 = pneg %p103
      $region14: #{tpu_custom_call.1} parent=5 // pred_check_branch
        %106 = sbr.rel (%p104) target = $region16
      $region15: #{tpu_custom_call.1} parent=5 // pred_region
        // Predicated region
        $region17: #{tpu_custom_call.1} parent=15 // pred_check
          %p107 = pneg %p35
        $region18: #{tpu_custom_call.1} parent=15 // pred_check_branch
          %109 = sbr.rel (%p107) target = $region20
        $region19: #{tpu_custom_call.1} parent=15 // pred_region
          %s110 = sand.u32 %s25, 1
          %s111 = scalar_lea.sflag [#allocation5], %s110
          %s112 = sand.u32 %s25, 1
          %s113 = smul.addr %s112, 8
          %s114 = scalar_lea.vmem [#allocation4], %s113
          %s116 = ssub.s32 128, 128
          %117 = vsyncadd %s111, %s116
          %s118 = smul.addr %s15, 128
          %s119 = scalar_lea.hbm %s0, %s118
          %s121 = sshll.u32 %s114, 4
          %s122 = int_to_ptr.vmem [resolvable:$true] %s121
          %124 = dma.hbm_to_vmem [thread:$0]  %s119, 128, %s122, %s111
        $region20: #{tpu_custom_call.1} parent=15 // pred_fallthru
          _
        // Predicated region
        $region21: #{tpu_custom_call.1} parent=15 // pred_check
          %p125 = pneg %p61
        $region22: #{tpu_custom_call.1} parent=15 // pred_check_branch
          %127 = sbr.rel (%p125) target = $region24
        $region23: #{tpu_custom_call.1} parent=15 // pred_region
          %s128 = sand.u32 %s51, 1
          %s129 = scalar_lea.sflag [#allocation8], %s128
          %s130 = sand.u32 %s51, 1
          %s131 = smul.addr %s130, 8
          %s132 = scalar_lea.vmem [#allocation7], %s131
          %s134 = ssub.s32 128, 128
          %135 = vsyncadd %s129, %s134
          %s136 = smul.addr %s15, 128
          %s137 = scalar_lea.hbm %s1, %s136
          %s139 = sshll.u32 %s132, 4
          %s140 = int_to_ptr.vmem [resolvable:$true] %s139
          %142 = dma.hbm_to_vmem [thread:$0]  %s137, 128, %s140, %s129
        $region24: #{tpu_custom_call.1} parent=15 // pred_fallthru
          _
      $region16: #{tpu_custom_call.1} parent=5 // pred_fallthru
        _
      %p143 = scmp.le.s32.totalorder 1, %s15
      %p144 = scmp.lt.s32.totalorder %s15, 3
      %p145 = pnand %p143, %p144
      %p146 = pneg %p145
      // Predicated region
      $region25: #{tpu_custom_call.1} parent=5 // pred_check
        _
      $region26: #{tpu_custom_call.1} parent=5 // pred_check_branch
        %148 = sbr.rel (%p145) target = $region28
      $region27: #{tpu_custom_call.1} parent=5 // pred_region
        %s149 = ssub.s32 %s15, 1
        %s150 = sand.u32 %s28, 1
        %s151 = scalar_lea.sflag [#allocation5], %s150
        %s152 = sand.u32 %s28, 1
        %s153 = smul.addr %s152, 8
        %s154 = scalar_lea.vmem [#allocation4], %s153
        // Predicated region
        $region29: #{tpu_custom_call.1} parent=27 // pred_check
          %p155 = pneg %p41
        $region30: #{tpu_custom_call.1} parent=27 // pred_check_branch
          %157 = sbr.rel (%p155) target = $region32
        $region31: #{tpu_custom_call.1} parent=27 // pred_region
          %158 = dma.done %s151, 128
        $region32: #{tpu_custom_call.1} parent=27 // pred_fallthru
          _
        %s159 = sand.u32 %s54, 1
        %s160 = scalar_lea.sflag [#allocation8], %s159
        %s161 = sand.u32 %s54, 1
        %s162 = smul.addr %s161, 8
        %s163 = scalar_lea.vmem [#allocation7], %s162
        // Predicated region
        $region33: #{tpu_custom_call.1} parent=27 // pred_check
          %p164 = pneg %p67
        $region34: #{tpu_custom_call.1} parent=27 // pred_check_branch
          %166 = sbr.rel (%p164) target = $region36
        $region35: #{tpu_custom_call.1} parent=27 // pred_region
          %167 = dma.done %s160, 128
        $region36: #{tpu_custom_call.1} parent=27 // pred_fallthru
          _
        %s168 = sand.u32 %s28, 1
        %s169 = scalar_lea.sflag [#allocation5], %s168
        %s170 = sand.u32 %s28, 1
        %s171 = smul.addr %s170, 8
        %s172 = scalar_lea.vmem [#allocation4], %s171
        %p173 = pneg %p41
        %p174 = pneg %p38
        %s175 = sand.u32 %s54, 1
        %s176 = scalar_lea.sflag [#allocation8], %s175
        %s177 = sand.u32 %s54, 1
        %s178 = smul.addr %s177, 8
        %s179 = scalar_lea.vmem [#allocation7], %s178
        %p180 = pneg %p67
        %p181 = pneg %p64
        %p182 = pneg %p88
        %p183 = pneg %p85
        %p184 = scmp.eq.s32.totalorder %s20, 0
        // Predicated region
        $region37: #{tpu_custom_call.1} parent=27 // pred_check
          %p185 = pneg %p184
        $region38: #{tpu_custom_call.1} parent=27 // pred_check_branch
          %187 = sbr.rel (%p185) target = $region40
        $region39: #{tpu_custom_call.1} parent=27 // pred_region
          %vm188 = vcmask 0
          %189 = vst.msk [vmem:[#allocation2] sm:$0x1] %vm188, 0.0
          %vm190 = vcmask 73728
          %191 = vst.msk [vmem:[#allocation3] sm:$0x1] %vm190, 0.0
        $region40: #{tpu_custom_call.1} parent=27 // pred_fallthru
          _
        %v192 = vld [vmem:[%s154] sm:$0xff]
        %v193 = vld [vmem:[%s163] sm:$0xff]
        %v194 = vmul.f32 %v192, %v193
        %vm195 = vcmask 80896
        %v196 = vsel %vm195, %v194, 0.0
        %197 = vadd.xlane.f32.xlu0 %v196
        %v198 = vpop.xlane.xlu0 %197
        %v199 = vlog2.pop %v198
        %v200 = vmul.f32 %v199, 0.6931472
        %v201 = vmax.f32 %v200, -100.0
        %v202 = vsub.f32 0.0, %v201
        %s203 = smul.u32 %s20, 8
        %v204 = vlaneseq
        %v205 = vshrl.u32 %v204, 7
        %v206 = vstv %s203
        %v207 = vadd.s32 %v206, %v205
        %vm208 = vcmp.lt.s32.totalorder %v207, 13
        %v209 = vsel %vm208, %v202, 0.0
        %v210 = vsel %vm208, 1, 0
        %vm211 = vcmp.eq.s32.totalorder %v210, 1
        %v212 = vsel %vm211, %v192, 0.0
        %v213 = vld [vmem:[#allocation2] sm:$0x1]
        %v214 = vrot.slane %v209, 4
        %v215 = vadd.f32 %v209, %v214
        %v216 = vrot.slane %v215, 2
        %v217 = vadd.f32 %v215, %v216
        %v218 = vrot.slane %v217, 1
        %v219 = vadd.f32 %v217, %v218
        %v220 = vadd.f32 %v213, %v219
        %vm221 = vcmask 0
        %222 = vst.msk [vmem:[#allocation2] sm:$0x1] %vm221, %v220
        %v223 = vld [vmem:[#allocation3] sm:$0x1]
        %v224 = vsel %vm195, %v212, 0.0
        %v225 = vrot.slane %v224, 4
        %v226 = vadd.f32 %v224, %v225
        %v227 = vrot.slane %v226, 2
        %v228 = vadd.f32 %v226, %v227
        %v229 = vrot.slane %v228, 1
        %v230 = vadd.f32 %v228, %v229
        %v231 = vadd.f32 %v223, %v230
        %vm232 = vcmask 73728
        %233 = vst.msk [vmem:[#allocation3] sm:$0x1] %vm232, %v231
        %p234 = scmp.eq.s32.totalorder %s20, 1
        // Predicated region
        $region41: #{tpu_custom_call.1} parent=27 // pred_check
          %p235 = pneg %p234
        $region42: #{tpu_custom_call.1} parent=27 // pred_check_branch
          %237 = sbr.rel (%p235) target = $region44
        $region43: #{tpu_custom_call.1} parent=27 // pred_region
          %v238 = vld [vmem:[#allocation2] sm:$0x1]
          %v239 = vadd.f32 %v238, 0.0
          %s240 = vtos %v239
          %s241 = smul.f32 %s240, 0.07692308
          %v242 = vld [vmem:[#allocation3] sm:$0x1]
          %v243 = vmul.f32 %v242, 0.07692308
          %v244 = vmax.f32 %v243, 1e-08
          %v245 = vlog2.pop %v244
          %v246 = vmul.f32 %v245, 0.6931472
          %v247 = vmul.f32 %v244, %v246
          %v248 = vsel %vm232, %v247, 0.0
          %249 = vadd.xlane.f32.xlu0 %v248
          %v250 = vpop.xlane.xlu0 %249
          %v251 = vrot.slane %v250, 4
          %v252 = vadd.f32 %v250, %v251
          %v253 = vrot.slane %v252, 2
          %v254 = vadd.f32 %v252, %v253
          %v255 = vrot.slane %v254, 1
          %v256 = vadd.f32 %v254, %v255
          %s257 = vtos %v256
          %s258 = ssub.f32 0.0, %s257
          %s259 = smul.f32 %s258, 2.0
          %s260 = ssub.f32 %s241, %s259
          %s261 = scalar_lea.smem [#allocation9], 0
          %262 = sst [smem:[%s261]] %s260
          %s263 = scalar_lea.smem [#allocation9], 1
          %264 = sst [smem:[%s263]] %s241
          %s265 = scalar_lea.smem [#allocation9], 2
          %266 = sst [smem:[%s265]] %s258
        $region44: #{tpu_custom_call.1} parent=27 // pred_fallthru
          _
        // Predicated region
        $region45: #{tpu_custom_call.1} parent=27 // pred_check
          %p267 = pneg %p85
        $region46: #{tpu_custom_call.1} parent=27 // pred_check_branch
          %269 = sbr.rel (%p267) target = $region48
        $region47: #{tpu_custom_call.1} parent=27 // pred_region
          %s271 = ssub.s32 16, 16
          %272 = vsyncadd [#allocation6], %s271
          %275 = dma.smem_to_hbm [#allocation9], 16, %s2, [#allocation6]
        $region48: #{tpu_custom_call.1} parent=27 // pred_fallthru
          _
        // Predicated region
        $region49: #{tpu_custom_call.1} parent=27 // pred_check
          %p276 = pneg %p85
        $region50: #{tpu_custom_call.1} parent=27 // pred_check_branch
          %278 = sbr.rel (%p276) target = $region52
        $region51: #{tpu_custom_call.1} parent=27 // pred_region
          %279 = dma.done [#allocation6], 16
        $region52: #{tpu_custom_call.1} parent=27 // pred_fallthru
          _
        %280 = sfence
      $region28: #{tpu_custom_call.1} parent=5 // pred_fallthru
        _
      %p281 = scmp.le.s32.totalorder 2, %s15
      // Predicated region
      $region53: #{tpu_custom_call.1} parent=5 // pred_check
        %p282 = pneg %p281
      $region54: #{tpu_custom_call.1} parent=5 // pred_check_branch
        %284 = sbr.rel (%p282) target = $region56
      $region55: #{tpu_custom_call.1} parent=5 // pred_region
        %s285 = ssub.s32 %s15, 2
      $region56: #{tpu_custom_call.1} parent=5 // pred_fallthru
        _
    $region6: #{tpu_custom_call.1} parent=1 // loop_footer
      %s19 = sadd.s32 1, %s15
    $region7: #{tpu_custom_call.1} parent=1 // loop_footer_branch
      %14 = sbr.rel target = $region3
    $region8: #{tpu_custom_call.1} parent=1 // loop_exit
      _
    %286 = vsyncpa [#allocation5], 1
    %s287 = scalar_lea.sflag [#allocation5], 1
    %288 = vsyncpa %s287, 1
    %289 = vsyncpa [#allocation8], 1
    %s290 = scalar_lea.sflag [#allocation8], 1
    %291 = vsyncpa %s290, 1
    %292 = vsyncpa [#allocation6], 1
    %s293 = scalar_lea.sflag [#allocation6], 1
    %294 = vsyncpa %s293, 1

</llo_original>
